<compile_context>
chip_gen: v5e
topology: v5e:2x2
jax: 0.10.0
libtpu: 0.0.40
codegen_flags: <defaults>
</compile_context>

<pallas_src>
import math
import functools

import jax
import jax.numpy as jnp
from jax.experimental import pallas as pl
from jax.experimental.pallas import tpu as pltpu

EMBED_DIM = 64
PROJ_DIM = 128
LN_EPS = 1e-5
_INV_SQRT2 = 1.0 / math.sqrt(2.0)


def projection_head_kernel(x_ref, w1_ref, b1_ref, w2_ref, b2_ref,
                           gamma_ref, beta_ref, o_ref, *, exact_gelu):
    # Cast x to the matmul dtype inside the kernel (x stays f32 in HBM; no
    # separate wrapper cast pass).
    x = x_ref[...].astype(w1_ref.dtype)                       # (TB, E)

    # projection: x @ W1 + b1  -> (TB, P); f32 accumulation + f32 bias.
    projected = jnp.dot(x, w1_ref[...],
                        preferred_element_type=jnp.float32) + b1_ref[...]

    if exact_gelu:
        # Exact erf GELU in f32 (nn.GELU() default) -- parity mode only; erf
        # lowers to a long VPU polynomial, so keep it off the fast path.
        g = 0.5 * projected * (1.0 + jax.lax.erf(projected * _INV_SQRT2))
        g = g.astype(w2_ref.dtype)
    else:
        # tanh-approx GELU on bf16 vregs: tanh goes to the EUP (free slot) and
        # bf16 packs (16,128) per vreg, halving the VALU op count.  g is fed
        # to the MXU in bf16 anyway, so the matmul precision is unchanged.
        g = jax.nn.gelu(projected.astype(w2_ref.dtype), approximate=True)

    # fc: g @ W2 + b2  -> (TB, P); f32 accumulation.
    h = jnp.dot(g, w2_ref[...],
                preferred_element_type=jnp.float32) + b2_ref[...]

    # dropout: identity in eval mode.
    # TODO(synk): training-mode dropout (random mask via pltpu.prng_*) not implemented.

    # residual in f32
    r = h + projected

    # LayerNorm over last dim (f32 math, output cast at the store).
    mean = jnp.mean(r, axis=-1, keepdims=True)
    centered = r - mean
    var = jnp.mean(centered * centered, axis=-1, keepdims=True)
    inv = jax.lax.rsqrt(var + LN_EPS)
    normed = centered * inv
    o_ref[...] = (normed * gamma_ref[...] + beta_ref[...]).astype(o_ref.dtype)


def _round_up(n, m):
    return ((n + m - 1) // m) * m


@functools.partial(jax.jit, static_argnames=("block_b", "matmul_dtype", "out_dtype"))
def projection_head(x, w1, b1, w2, b2, gamma, beta, *,
                    block_b=2048, matmul_dtype=jnp.bfloat16, out_dtype=None):
    B, E = x.shape
    P = w1.shape[1]

    mm_dt = jnp.dtype(matmul_dtype)
    exact = mm_dt == jnp.dtype(jnp.float32)
    if out_dtype is None:
        # bf16 output on the fast path (halves HBM writeback); f32 in parity mode.
        out_dt = jnp.dtype(jnp.float32) if exact else jnp.dtype(jnp.bfloat16)
    else:
        out_dt = jnp.dtype(out_dtype)

    # Batch tile: multiple of 8 sublanes.  Clamp so the grid has >= 2 steps
    # whenever B >= 16: (a) both v7x TensorCores get work under the "parallel"
    # batch axis, (b) input DMA overlaps compute via double buffering.
    bb = min(int(block_b), _round_up(B, 8))
    if B >= 16:
        bb = min(bb, _round_up(pl.cdiv(B, 2), 8))
    bb = max(8, (bb // 8) * 8)
    grid_b = pl.cdiv(B, bb)
    B_pad = grid_b * bb

    xd = x
    if B_pad != B:
        xd = jnp.pad(xd, ((0, B_pad - B), (0, 0)))

    w1d = w1.astype(mm_dt)
    w2d = w2.astype(mm_dt)

    mm_item = mm_dt.itemsize
    x_item = x.dtype.itemsize
    out_item = out_dt.itemsize
    param_bytes = E * P * mm_item + P * P * mm_item + 4 * P * 4
    vmem_est = (2 * bb * E * x_item        # x tile (double-buffered, f32 in HBM)
                + 2 * bb * P * out_item    # out tile (double-buffered)
                + 2 * param_bytes          # params (worst case double-buffered)
                + 6 * bb * P * 4)          # projected / g / h / r / LN temps (f32)

    # Cap the scoped-VMEM request at the actual chip capacity (v7x has only
    # 64 MiB physical), minus headroom for Mosaic-internal scratch.
    try:
        vmem_cap = int(getattr(pltpu.get_tpu_info(), "vmem_capacity_bytes",
                               128 * 2**20))
    except Exception:  # e.g. not running on a TPU backend
        vmem_cap = 128 * 2**20
    vmem_ceiling = max(32 * 2**20, vmem_cap - 16 * 2**20)
    vmem_limit = int(min(vmem_ceiling, max(32 * 2**20, vmem_est + (4 << 20))))

    cost = pl.CostEstimate(
        flops=2 * B_pad * (E * P + P * P),
        transcendentals=B_pad * P,                     # erf/tanh per output elem
        bytes_accessed=B_pad * E * x_item + B_pad * P * out_item + param_bytes,
    )

    kernel = functools.partial(projection_head_kernel, exact_gelu=exact)

    # NOTE: params (W1, b1, W2, b2, gamma, beta) use constant index_maps so the
    # pipeline keeps them resident across grid steps; pl.Buffered(1) would only
    # shave ~100 KB of the already-small VMEM footprint, so it is not used.
    out = pl.pallas_call(
        kernel,
        out_shape=jax.ShapeDtypeStruct((B_pad, P), out_dt),
        grid_spec=pltpu.PrefetchScalarGridSpec(
            num_scalar_prefetch=0,
            grid=(grid_b,),
            in_specs=[
                pl.BlockSpec((bb, E), lambda i: (i, 0)),        # x tile
                pl.BlockSpec((E, P), lambda i: (0, 0)),         # W1
                pl.BlockSpec((1, P), lambda i: (0, 0)),         # b1
                pl.BlockSpec((P, P), lambda i: (0, 0)),         # W2
                pl.BlockSpec((1, P), lambda i: (0, 0)),         # b2
                pl.BlockSpec((1, P), lambda i: (0, 0)),         # gamma
                pl.BlockSpec((1, P), lambda i: (0, 0)),         # beta
            ],
            out_specs=pl.BlockSpec((bb, P), lambda i: (i, 0)),
        ),
        compiler_params=pltpu.CompilerParams(
            dimension_semantics=("parallel",),
            vmem_limit_bytes=vmem_limit),
        cost_estimate=cost,
    )(xd, w1d, b1, w2d, b2, gamma, beta)

    if B_pad != B:
        out = out[:B]
    return out


def init_params(key, embedding_dim=EMBED_DIM, projection_dim=PROJ_DIM):
    """Deterministic init mirroring nn.Linear / nn.LayerNorm shapes.

    PyTorch Linear weight is (out, in); we store the transpose (in, out).
    """
    k1, k2, k3, k4 = jax.random.split(key, 4)
    lim1 = 1.0 / math.sqrt(embedding_dim)
    lim2 = 1.0 / math.sqrt(projection_dim)
    w1 = jax.random.uniform(k1, (embedding_dim, projection_dim),
                            jnp.float32, -lim1, lim1)
    b1 = jax.random.uniform(k2, (1, projection_dim), jnp.float32, -lim1, lim1)
    w2 = jax.random.uniform(k3, (projection_dim, projection_dim),
                            jnp.float32, -lim2, lim2)
    b2 = jax.random.uniform(k4, (1, projection_dim), jnp.float32, -lim2, lim2)
    gamma = jnp.ones((1, projection_dim), jnp.float32)
    beta = jnp.zeros((1, projection_dim), jnp.float32)
    return w1, b1, w2, b2, gamma, beta


def reference(x, w1, b1, w2, b2, gamma, beta):
    projected = x @ w1 + b1
    g = 0.5 * projected * (1.0 + jax.lax.erf(projected / jnp.sqrt(2.0)))
    h = g @ w2 + b2
    r = h + projected
    mean = r.mean(-1, keepdims=True)
    var = ((r - mean) ** 2).mean(-1, keepdims=True)
    return (r - mean) / jnp.sqrt(var + LN_EPS) * gamma + beta


if __name__ == "__main__":
    key = jax.random.PRNGKey(0)
    kx, kp = jax.random.split(key)
    B = 8
    x = jax.random.normal(kx, (B, EMBED_DIM), jnp.float32)
    params = init_params(kp)
    ref = reference(x, *params)

    # Exact-parity path (f32 matmuls, exact erf GELU, f32 output).
    out_f32 = jax.block_until_ready(
        projection_head(x, *params, matmul_dtype=jnp.float32))
    assert out_f32.shape == (B, PROJ_DIM) and out_f32.dtype == jnp.float32
    assert jnp.allclose(out_f32, ref, atol=1e-4, rtol=1e-4), (
        float(jnp.max(jnp.abs(out_f32 - ref))))

    # Default fast path (bf16 MXU operands, bf16 tanh-GELU, bf16 output,
    # f32 accumulation / residual / LayerNorm).
    out_fast = jax.block_until_ready(projection_head(x, *params))
    assert out_fast.shape == (B, PROJ_DIM)
    out_fast_f32 = out_fast.astype(jnp.float32)
    assert bool(jnp.all(jnp.isfinite(out_fast_f32)))
    assert jnp.allclose(out_fast_f32, ref, atol=1e-1, rtol=1e-1), (
        float(jnp.max(jnp.abs(out_fast_f32 - ref))))

    # Ragged batch (B not a multiple of the tile): wrapper pads and slices.
    B2 = 13
    x2 = jax.random.normal(kx, (B2, EMBED_DIM), jnp.float32)
    out2 = jax.block_until_ready(
        projection_head(x2, *params, matmul_dtype=jnp.float32))
    ref2 = reference(x2, *params)
    assert out2.shape == (B2, PROJ_DIM)
    assert jnp.allclose(out2, ref2, atol=1e-4, rtol=1e-4), (
        float(jnp.max(jnp.abs(out2 - ref2))))

    print("KERNEL_OK")
</pallas_src>

<mosaic_0001>
module attributes {stable_mosaic.version = 11 : i64} {
  func.func @projection_head_kernel(%arg0: i32, %arg1: memref<8x64xf32, #tpu.memory_space<vmem>>, %arg2: memref<64x128xf32, #tpu.memory_space<vmem>>, %arg3: memref<1x128xf32, #tpu.memory_space<vmem>>, %arg4: memref<128x128xf32, #tpu.memory_space<vmem>>, %arg5: memref<1x128xf32, #tpu.memory_space<vmem>>, %arg6: memref<1x128xf32, #tpu.memory_space<vmem>>, %arg7: memref<1x128xf32, #tpu.memory_space<vmem>>, %arg8: memref<8x128xf32, #tpu.memory_space<vmem>>) attributes {dimension_semantics = [#tpu.dimension_semantics<parallel>], iteration_bounds = array<i64: 1>, scalar_prefetch = 0 : i64, scratch_operands = 0 : i64, tpu.core_type = #tpu.core_type<tc>, window_params = [{transform_indices = @transform_0, window_bounds = array<i64: 8, 64>}, {pipeline_mode = #tpu.pipeline_mode<synchronous>, transform_indices = @transform_1, window_bounds = array<i64: 64, 128>}, {pipeline_mode = #tpu.pipeline_mode<synchronous>, transform_indices = @transform_2, window_bounds = array<i64: 1, 128>}, {pipeline_mode = #tpu.pipeline_mode<synchronous>, transform_indices = @transform_3, window_bounds = array<i64: 128, 128>}, {pipeline_mode = #tpu.pipeline_mode<synchronous>, transform_indices = @transform_4, window_bounds = array<i64: 1, 128>}, {pipeline_mode = #tpu.pipeline_mode<synchronous>, transform_indices = @transform_5, window_bounds = array<i64: 1, 128>}, {pipeline_mode = #tpu.pipeline_mode<synchronous>, transform_indices = @transform_6, window_bounds = array<i64: 1, 128>}, {transform_indices = @transform_7, window_bounds = array<i64: 8, 128>}]} {
    %c0 = arith.constant 0 : index
    %c0_0 = arith.constant 0 : index
    %0 = vector.load %arg1[%c0, %c0_0] : memref<8x64xf32, #tpu.memory_space<vmem>>, vector<8x64xf32>
    %c0_1 = arith.constant 0 : index
    %c0_2 = arith.constant 0 : index
    %1 = vector.load %arg2[%c0_1, %c0_2] : memref<64x128xf32, #tpu.memory_space<vmem>>, vector<64x128xf32>
    %cst = arith.constant dense<0.000000e+00> : vector<8x128xf32>
    %2 = tpu.matmul %0, %1, %cst {dimension_numbers = #tpu.dot_dimension_numbers<[1], [0], [0], [1], [0, 0, 1, 1], [], []>} : vector<8x64xf32>, vector<64x128xf32>, vector<8x128xf32> -> vector<8x128xf32>
    %c0_3 = arith.constant 0 : index
    %c0_4 = arith.constant 0 : index
    %3 = vector.load %arg3[%c0_3, %c0_4] : memref<1x128xf32, #tpu.memory_space<vmem>>, vector<1x128xf32>
    %4 = vector.broadcast %3 : vector<1x128xf32> to vector<8x128xf32>
    %5 = arith.addf %2, %4 : vector<8x128xf32>
    %cst_5 = arith.constant 5.000000e-01 : f32
    %6 = vector.broadcast %cst_5 : f32 to vector<8x128xf32>
    %7 = arith.mulf %6, %5 : vector<8x128xf32>
    %cst_6 = arith.constant 0.707106769 : f32
    %8 = vector.broadcast %cst_6 : f32 to vector<8x128xf32>
    %9 = arith.mulf %5, %8 : vector<8x128xf32>
    %10 = math.erf %9 : vector<8x128xf32>
    %cst_7 = arith.constant 1.000000e+00 : f32
    %11 = vector.broadcast %cst_7 : f32 to vector<8x128xf32>
    %12 = arith.addf %11, %10 : vector<8x128xf32>
    %13 = arith.mulf %7, %12 : vector<8x128xf32>
    %c0_8 = arith.constant 0 : index
    %c0_9 = arith.constant 0 : index
    %14 = vector.load %arg4[%c0_8, %c0_9] : memref<128x128xf32, #tpu.memory_space<vmem>>, vector<128x128xf32>
    %cst_10 = arith.constant dense<0.000000e+00> : vector<8x128xf32>
    %15 = tpu.matmul %13, %14, %cst_10 {dimension_numbers = #tpu.dot_dimension_numbers<[1], [0], [0], [1], [0, 0, 1, 1], [], []>} : vector<8x128xf32>, vector<128x128xf32>, vector<8x128xf32> -> vector<8x128xf32>
    %c0_11 = arith.constant 0 : index
    %c0_12 = arith.constant 0 : index
    %16 = vector.load %arg5[%c0_11, %c0_12] : memref<1x128xf32, #tpu.memory_space<vmem>>, vector<1x128xf32>
    %17 = vector.broadcast %16 : vector<1x128xf32> to vector<8x128xf32>
    %18 = arith.addf %15, %17 : vector<8x128xf32>
    %19 = arith.addf %18, %5 : vector<8x128xf32>
    %cst_13 = arith.constant dense<0.000000e+00> : vector<8xf32>
    %20 = vector.multi_reduction <add>, %19, %cst_13 [1] : vector<8x128xf32> to vector<8xf32>
    %21 = vector.shape_cast %20 : vector<8xf32> to vector<8x1xf32>
    %cst_14 = arith.constant 1.280000e+02 : f32
    %22 = vector.broadcast %cst_14 : f32 to vector<8x1xf32>
    %23 = arith.divf %21, %22 : vector<8x1xf32>
    %24 = vector.broadcast %23 : vector<8x1xf32> to vector<8x128xf32>
    %25 = arith.subf %19, %24 : vector<8x128xf32>
    %26 = arith.mulf %25, %25 : vector<8x128xf32>
    %cst_15 = arith.constant dense<0.000000e+00> : vector<8xf32>
    %27 = vector.multi_reduction <add>, %26, %cst_15 [1] : vector<8x128xf32> to vector<8xf32>
    %28 = vector.shape_cast %27 : vector<8xf32> to vector<8x1xf32>
    %cst_16 = arith.constant 1.280000e+02 : f32
    %29 = vector.broadcast %cst_16 : f32 to vector<8x1xf32>
    %30 = arith.divf %28, %29 : vector<8x1xf32>
    %cst_17 = arith.constant 9.99999974E-6 : f32
    %31 = vector.broadcast %cst_17 : f32 to vector<8x1xf32>
    %32 = arith.addf %30, %31 : vector<8x1xf32>
    %33 = math.rsqrt %32 : vector<8x1xf32>
    %34 = vector.broadcast %33 : vector<8x1xf32> to vector<8x128xf32>
    %35 = arith.mulf %25, %34 : vector<8x128xf32>
    %c0_18 = arith.constant 0 : index
    %c0_19 = arith.constant 0 : index
    %36 = vector.load %arg6[%c0_18, %c0_19] : memref<1x128xf32, #tpu.memory_space<vmem>>, vector<1x128xf32>
    %37 = vector.broadcast %36 : vector<1x128xf32> to vector<8x128xf32>
    %38 = arith.mulf %35, %37 : vector<8x128xf32>
    %c0_20 = arith.constant 0 : index
    %c0_21 = arith.constant 0 : index
    %39 = vector.load %arg7[%c0_20, %c0_21] : memref<1x128xf32, #tpu.memory_space<vmem>>, vector<1x128xf32>
    %40 = vector.broadcast %39 : vector<1x128xf32> to vector<8x128xf32>
    %41 = arith.addf %38, %40 : vector<8x128xf32>
    %c0_22 = arith.constant 0 : index
    %c0_23 = arith.constant 0 : index
    %42 = vector.load %arg8[%c0_22, %c0_23] : memref<8x128xf32, #tpu.memory_space<vmem>>, vector<8x128xf32>
    tpu.vector_store %arg8[%c0_22, %c0_23], %41 {strides = array<i32>} : memref<8x128xf32, #tpu.memory_space<vmem>>, vector<8x128xf32>,
    return
  }
  func.func @transform_0(%arg0: i32) -> (i32, i32) {
    %c0_i32 = arith.constant 0 : i32
    %c0_i32_0 = arith.constant 0 : i32
    return %arg0, %c0_i32 : i32, i32
  }
  func.func @transform_1(%arg0: i32) -> (i32, i32) {
    %c0_i32 = arith.constant 0 : i32
    %c0_i32_0 = arith.constant 0 : i32
    %c0_i32_1 = arith.constant 0 : i32
    return %c0_i32, %c0_i32_0 : i32, i32
  }
  func.func @transform_2(%arg0: i32) -> (i32, i32) {
    %c0_i32 = arith.constant 0 : i32
    %c0_i32_0 = arith.constant 0 : i32
    %c0_i32_1 = arith.constant 0 : i32
    return %c0_i32, %c0_i32_0 : i32, i32
  }
  func.func @transform_3(%arg0: i32) -> (i32, i32) {
    %c0_i32 = arith.constant 0 : i32
    %c0_i32_0 = arith.constant 0 : i32
    %c0_i32_1 = arith.constant 0 : i32
    return %c0_i32, %c0_i32_0 : i32, i32
  }
  func.func @transform_4(%arg0: i32) -> (i32, i32) {
    %c0_i32 = arith.constant 0 : i32
    %c0_i32_0 = arith.constant 0 : i32
    %c0_i32_1 = arith.constant 0 : i32
    return %c0_i32, %c0_i32_0 : i32, i32
  }
  func.func @transform_5(%arg0: i32) -> (i32, i32) {
    %c0_i32 = arith.constant 0 : i32
    %c0_i32_0 = arith.constant 0 : i32
    %c0_i32_1 = arith.constant 0 : i32
    return %c0_i32, %c0_i32_0 : i32, i32
  }
  func.func @transform_6(%arg0: i32) -> (i32, i32) {
    %c0_i32 = arith.constant 0 : i32
    %c0_i32_0 = arith.constant 0 : i32
    %c0_i32_1 = arith.constant 0 : i32
    return %c0_i32, %c0_i32_0 : i32, i32
  }
  func.func @transform_7(%arg0: i32) -> (i32, i32) {
    %c0_i32 = arith.constant 0 : i32
    %c0_i32_0 = arith.constant 0 : i32
    return %arg0, %c0_i32 : i32, i32
  }
}

</mosaic_0001>

<llo_original>
// kernel: projection_head.1
$region0: #{projection_head.1}
  #allocation0 [shape = 'u32[]', space=smem, size = 0x4, offset = 0x4, fixed_abs, tag = 'smem constant byte address 0x4 - core index']
  #allocation1 [shape = 'u32[72,128]{1,0:T(1,128)}', space=vmem, size = 0x9000, scoped, tag = 'internal scratch']
  %s0 = inlined_call_operand.hbm [shape: f32[8,64], index: 0, kind: input, shape index: {}]
  %s1 = inlined_call_operand.hbm [shape: f32[64,128], index: 1, kind: input, shape index: {}]
  %s2 = inlined_call_operand.vmem [shape: f32[1,128], index: 2, kind: input, shape index: {}]
  %s3 = inlined_call_operand.hbm [shape: f32[128,128], index: 3, kind: input, shape index: {}]
  %s4 = inlined_call_operand.vmem [shape: f32[1,128], index: 4, kind: input, shape index: {}]
  %s5 = inlined_call_operand.vmem [shape: f32[1,128], index: 5, kind: input, shape index: {}]
  %s6 = inlined_call_operand.vmem [shape: f32[1,128], index: 6, kind: input, shape index: {}]
  %s7 = inlined_call_operand.hbm [shape: f32[8,128], index: 7, kind: output, shape index: {}]
  %s8 = sld [smem:[#allocation0]]
  $region50: #{projection_head.1} parent=0
    _
  %s10 = ssub.s32 1, %s8
  %s11 = scalar_select 0, %s10, %s8
  $region1: #{projection_head.1} parent=0
    #allocation2 [shape = 'u8[4096]{0}', space=vmem, size = 0x1000, scoped, tag = 'input window, operand 0, single buffered']
    #allocation3 [shape = 's32[1]{0}', space=sflag, size = 0x4, scoped, tag = 'scoped memory for projection_head.1']
    #allocation4 [shape = 's32[1]{0}', space=sflag, size = 0x4, scoped, tag = 'scoped memory for projection_head.1']
    #allocation5 [shape = 'u8[32768]{0}', space=vmem, size = 0x8000, scoped, tag = 'input window, operand 1, single buffered']
    #allocation6 [shape = 's32[1]{0}', space=sflag, size = 0x4, scoped, tag = 'scoped memory for projection_head.1']
    #allocation7 [shape = 'u8[65536]{0}', space=vmem, size = 0x10000, scoped, tag = 'input window, operand 3, single buffered']
    #allocation8 [shape = 'u8[4096]{0}', space=vmem, size = 0x1000, scoped, tag = 'output window, operand 0, single buffered']
    %12 = vsyncpa [#allocation3], 0
    %13 = vsyncpa [#allocation6], 0
    %14 = vsyncpa [#allocation4], 0
    // Predicated region
    $region2: #{projection_head.1} parent=1 // pred_check
      _
    $region3: #{projection_head.1} parent=1 // pred_check_branch
      %16 = sbr.rel (0) target = $region5
    $region4: #{projection_head.1} parent=1 // pred_region
      %18 = vsyncadd [#allocation3], 0
      %s20 = sshll.u32 %s0, 4
      %s21 = int_to_ptr.hbm [resolvable:$true] %s20
      %s22 = sshll.u32 [#allocation2], 4
      %s23 = int_to_ptr.vmem [resolvable:$true] %s22
      %25 = dma.hbm_to_vmem [thread:$0]  %s21, 128, %s23, [#allocation3]
    $region5: #{projection_head.1} parent=1 // pred_fallthru
      _
    // Predicated region
    $region6: #{projection_head.1} parent=1 // pred_check
      _
    $region7: #{projection_head.1} parent=1 // pred_check_branch
      %27 = sbr.rel (0) target = $region9
    $region8: #{projection_head.1} parent=1 // pred_region
      %29 = vsyncadd [#allocation6], 0
      %s30 = sshll.u32 %s1, 4
      %s31 = int_to_ptr.hbm [resolvable:$true] %s30
      %s32 = sshll.u32 [#allocation5], 4
      %s33 = int_to_ptr.vmem [resolvable:$true] %s32
      %38 = dma.hbm_to_vmem [thread:$0]  %s31, 1024, %s33, [#allocation6], 128, 128, 8
    $region9: #{projection_head.1} parent=1 // pred_fallthru
      _
    // Predicated region
    $region10: #{projection_head.1} parent=1 // pred_check
      _
    $region11: #{projection_head.1} parent=1 // pred_check_branch
      %40 = sbr.rel (0) target = $region13
    $region12: #{projection_head.1} parent=1 // pred_region
      _
    $region13: #{projection_head.1} parent=1 // pred_fallthru
      _
    // Predicated region
    $region14: #{projection_head.1} parent=1 // pred_check
      _
    $region15: #{projection_head.1} parent=1 // pred_check_branch
      %42 = sbr.rel (0) target = $region17
    $region16: #{projection_head.1} parent=1 // pred_region
      %44 = vsyncadd [#allocation6], 0
      %s45 = sshll.u32 %s3, 4
      %s46 = int_to_ptr.hbm [resolvable:$true] %s45
      %s47 = sshll.u32 [#allocation7], 4
      %s48 = int_to_ptr.vmem [resolvable:$true] %s47
      %53 = dma.hbm_to_vmem [thread:$0]  %s46, 2048, %s48, [#allocation6], 128, 128, 8
    $region17: #{projection_head.1} parent=1 // pred_fallthru
      _
    // Predicated region
    $region18: #{projection_head.1} parent=1 // pred_check
      _
    $region19: #{projection_head.1} parent=1 // pred_check_branch
      %55 = sbr.rel (0) target = $region21
    $region20: #{projection_head.1} parent=1 // pred_region
      _
    $region21: #{projection_head.1} parent=1 // pred_fallthru
      _
    // Predicated region
    $region22: #{projection_head.1} parent=1 // pred_check
      _
    $region23: #{projection_head.1} parent=1 // pred_check_branch
      %57 = sbr.rel (0) target = $region25
    $region24: #{projection_head.1} parent=1 // pred_region
      _
    $region25: #{projection_head.1} parent=1 // pred_fallthru
      _
    // Predicated region
    $region26: #{projection_head.1} parent=1 // pred_check
      _
    $region27: #{projection_head.1} parent=1 // pred_check_branch
      %59 = sbr.rel (0) target = $region29
    $region28: #{projection_head.1} parent=1 // pred_region
      _
    $region29: #{projection_head.1} parent=1 // pred_fallthru
      _
    // Predicated region
    $region30: #{projection_head.1} parent=1 // pred_check
      _
    $region31: #{projection_head.1} parent=1 // pred_check_branch
      %61 = sbr.rel (0) target = $region33
    $region32: #{projection_head.1} parent=1 // pred_region
      %63 = dma.done [#allocation3], 128
    $region33: #{projection_head.1} parent=1 // pred_fallthru
      _
    // Predicated region
    $region34: #{projection_head.1} parent=1 // pred_check
      _
    $region35: #{projection_head.1} parent=1 // pred_check_branch
      %65 = sbr.rel (0) target = $region37
    $region36: #{projection_head.1} parent=1 // pred_region
      %67 = dma.done [#allocation6], 1024
    $region37: #{projection_head.1} parent=1 // pred_fallthru
      _
    // Predicated region
    $region38: #{projection_head.1} parent=1 // pred_check
      _
    $region39: #{projection_head.1} parent=1 // pred_check_branch
      %69 = sbr.rel (0) target = $region41
    $region40: #{projection_head.1} parent=1 // pred_region
      %71 = dma.done [#allocation6], 2048
    $region41: #{projection_head.1} parent=1 // pred_fallthru
      _
    %v72 = vld [vmem:[#allocation2] sm:$0xff]
    %v73 = vld [vmem:[#allocation5] sm:$0xff]
    %v74 = vld [vmem:[#allocation5 + $0x8] sm:$0xff]
    %v75 = vld [vmem:[#allocation5 + $0x10] sm:$0xff]
    %v76 = vld [vmem:[#allocation5 + $0x18] sm:$0xff]
    %v77 = vld [vmem:[#allocation5 + $0x20] sm:$0xff]
    %v78 = vld [vmem:[#allocation5 + $0x28] sm:$0xff]
    %v79 = vld [vmem:[#allocation5 + $0x30] sm:$0xff]
    %v80 = vld [vmem:[#allocation5 + $0x38] sm:$0xff]
    %v81 = vld [vmem:[%s2] sm:$0x1]
    %v83 = vperm.slane %v81, 0
    %vm85 = vcmask 523264
    %v87 = vsel %vm85, %v72, 0
    %89 = vmatpush.msra.mxu0 0.0
    %90 = vmatpush.msra.mxu0 0.0
    %91 = vmatpush.msra.mxu0 0.0
    %92 = vmatpush.msra.mxu0 0.0
    %93 = vmatpush.msra.mxu0 0.0
    %94 = vmatpush.msra.mxu0 0.0
    %95 = vmatpush.msra.mxu0 0.0
    %96 = vmatpush.msra.mxu0 0.0
    %97 = vmatpush.msra.mxu0 %v80
    %98 = vmatpush.msra.mxu0 %v79
    %99 = vmatpush.msra.mxu0 %v78
    %100 = vmatpush.msra.mxu0 %v77
    %101 = vmatpush.msra.mxu0 %v76
    %102 = vmatpush.msra.mxu0 %v75
    %103 = vmatpush.msra.mxu0 %v74
    %104 = vmatpush.msra.mxu0 %v73
    %105 = vmatmul.f32.gmra.mxu0 %v87
    %v106 = vpop.f32.mrf.mxu0
    %v107 = vadd.f32 %v83, %v106
    %108 = vdwg.mxu0
    %v109 = vmul.f32 %v107, 0.5
    %v110 = vmul.f32 %v107, 0.70710677
    %v111 = vmul.f32 %v110, %v110
    %v112 = vmin.f32 16.0, %v111
    %v113 = vmul.f32 %v112, 2.1237322e-06
    %v114 = vadd.f32 %v113, 0.00028619796
    %v115 = vmul.f32 %v112, %v114
    %v116 = vadd.f32 %v115, 0.0036580483
    %v117 = vmul.f32 %v112, %v116
    %v118 = vadd.f32 %v117, 0.05243302
    %v119 = vmul.f32 %v112, %v118
    %v120 = vadd.f32 %v119, 0.18741608
    %v121 = vmul.f32 %v112, %v120
    %v122 = vadd.f32 %v121, 1.1283791
    %v123 = vmul.f32 %v110, %v122
    %v124 = vmul.f32 %v112, 3.8918573e-05
    %v125 = vadd.f32 %v124, 0.001143296
    %v126 = vmul.f32 %v112, %v125
    %v127 = vadd.f32 %v126, 0.014752088
    %v128 = vmul.f32 %v112, %v127
    %v129 = vadd.f32 %v128, 0.112945676
    %v130 = vmul.f32 %v112, %v129
    %v131 = vadd.f32 %v130, 0.4994258
    %v132 = vmul.f32 %v112, %v131
    %v133 = vadd.f32 %v132, 1.0
    %v134 = vrcp.pop %v133
    %v135 = vmul.f32 %v133, %v134
    %v136 = vsub.f32 1.0, %v135
    %v137 = vmul.f32 %v134, %v136
    %v138 = vadd.f32 %v134, %v137
    %vm139 = vweird.f32 %v133
    %vm140 = vweird.f32 %v134
    %vm141 = vmor %vm139, %vm140
    %v142 = vsel %vm141, %v134, %v138
    %v143 = vand.u32 2147483647, %v133
    %vm144 = vcmp.eq.f32.partialorder %v143, 8.507059e+37
    %v145 = vand.u32 %v133, 2147483648
    %v146 = vor.u32 1.1754944e-38, %v145
    %v147 = vsel %vm144, %v146, %v142
    %v148 = vmul.f32 %v123, %v147
    %v149 = vmin.f32 %v148, 1.0
    %v150 = vmax.f32 %v149, -1.0
    %v151 = vadd.f32 %v150, 1.0
    %v152 = vmul.f32 %v109, %v151
    %v153 = vld [vmem:[#allocation7] sm:$0xff]
    %v154 = vld [vmem:[#allocation7 + $0x8] sm:$0xff]
    %v155 = vld [vmem:[#allocation7 + $0x10] sm:$0xff]
    %v156 = vld [vmem:[#allocation7 + $0x18] sm:$0xff]
    %v157 = vld [vmem:[#allocation7 + $0x20] sm:$0xff]
    %v158 = vld [vmem:[#allocation7 + $0x28] sm:$0xff]
    %v159 = vld [vmem:[#allocation7 + $0x30] sm:$0xff]
    %v160 = vld [vmem:[#allocation7 + $0x38] sm:$0xff]
    %v161 = vld [vmem:[#allocation7 + $0x40] sm:$0xff]
    %v162 = vld [vmem:[#allocation7 + $0x48] sm:$0xff]
    %v163 = vld [vmem:[#allocation7 + $0x50] sm:$0xff]
    %v164 = vld [vmem:[#allocation7 + $0x58] sm:$0xff]
    %v165 = vld [vmem:[#allocation7 + $0x60] sm:$0xff]
    %v166 = vld [vmem:[#allocation7 + $0x68] sm:$0xff]
    %v167 = vld [vmem:[#allocation7 + $0x70] sm:$0xff]
    %v168 = vld [vmem:[#allocation7 + $0x78] sm:$0xff]
    %v169 = vld [vmem:[%s4] sm:$0x1]
    %v171 = vperm.slane %v169, 0
    %173 = vmatpush.msra.mxu0 %v168
    %174 = vmatpush.msra.mxu0 %v167
    %175 = vmatpush.msra.mxu0 %v166
    %176 = vmatpush.msra.mxu0 %v165
    %177 = vmatpush.msra.mxu0 %v164
    %178 = vmatpush.msra.mxu0 %v163
    %179 = vmatpush.msra.mxu0 %v162
    %180 = vmatpush.msra.mxu0 %v161
    %181 = vmatpush.msra.mxu0 %v160
    %182 = vmatpush.msra.mxu0 %v159
    %183 = vmatpush.msra.mxu0 %v158
    %184 = vmatpush.msra.mxu0 %v157
    %185 = vmatpush.msra.mxu0 %v156
    %186 = vmatpush.msra.mxu0 %v155
    %187 = vmatpush.msra.mxu0 %v154
    %188 = vmatpush.msra.mxu0 %v153
    %189 = vmatmul.f32.gmra.mxu0 %v152
    %v190 = vpop.f32.mrf.mxu0
    %v191 = vadd.f32 %v171, %v190
    %192 = vdwg.mxu0
    %v193 = vadd.f32 %v191, %v107
    %194 = vadd.xlane.f32.xlu0 %v193
    %v195 = vpop.xlane.xlu0 %194
    %v196 = vrcp.pop 128.0
    %v197 = vmul.f32 128.0, %v196
    %v198 = vsub.f32 1.0, %v197
    %v199 = vmul.f32 %v196, %v198
    %v200 = vadd.f32 %v196, %v199
    %vm201 = vweird.f32 %v196
    %v202 = vsel %vm201, %v196, %v200
    %v203 = vmul.f32 %v195, %v202
    %v204 = vsub.f32 %v193, %v203
    %v205 = vmul.f32 %v204, %v204
    %206 = vadd.xlane.f32.xlu0 %v205
    %v207 = vpop.xlane.xlu0 %206
    %v208 = vmul.f32 %v207, %v202
    %v209 = vadd.f32 %v208, 1e-05
    %v210 = vrsqrt.pop %v209
    %v211 = vmul.f32 %v210, %v209
    %v212 = vmul.f32 %v211, %v210
    %v213 = vmul.f32 0.5, %v212
    %v214 = vsub.f32 1.5, %v213
    %v215 = vmul.f32 %v210, %v214
    %vm216 = vweird.f32 %v209
    %vm217 = vweird.f32 %v210
    %vm218 = vmor %vm216, %vm217
    %v219 = vsel %vm218, %v210, %v215
    %v220 = vmul.f32 %v204, %v219
    %v221 = vld [vmem:[%s5] sm:$0x1]
    %v223 = vperm.slane %v221, 0
    %v225 = vmul.f32 %v220, %v223
    %v226 = vld [vmem:[%s6] sm:$0x1]
    %v228 = vperm.slane %v226, 0
    %v230 = vadd.f32 %v225, %v228
    %231 = vst [vmem:[#allocation8] sm:$0xff] %v230
    // Predicated region
    $region42: #{projection_head.1} parent=1 // pred_check
      _
    $region43: #{projection_head.1} parent=1 // pred_check_branch
      %233 = sbr.rel (0) target = $region45
    $region44: #{projection_head.1} parent=1 // pred_region
      %235 = vsyncadd [#allocation4], 0
      %s237 = sshll.u32 [#allocation8], 4
      %s238 = int_to_ptr.vmem [resolvable:$true] %s237
      %s239 = sshll.u32 %s7, 4
      %s240 = int_to_ptr.hbm [resolvable:$true] %s239
      %242 = dma.vmem_to_hbm [thread:$0]  %s238, 128, %s240, [#allocation4]
    $region45: #{projection_head.1} parent=1 // pred_fallthru
      _
    // Predicated region
    $region46: #{projection_head.1} parent=1 // pred_check
      _
    $region47: #{projection_head.1} parent=1 // pred_check_branch
      %244 = sbr.rel (0) target = $region49
    $region48: #{projection_head.1} parent=1 // pred_region
      %246 = dma.done [#allocation4], 128
    $region49: #{projection_head.1} parent=1 // pred_fallthru
      _
    %247 = vsyncpa [#allocation3], 1
    %248 = vsyncpa [#allocation6], 1
    %249 = vsyncpa [#allocation4], 1

</llo_original>
